<compile_context>
chip_gen: v5e
topology: v5e:2x2
jax: 0.10.0
libtpu: 0.0.40
codegen_flags: <defaults>
</compile_context>

<pallas_src>
import functools

import jax
import jax.numpy as jnp
from jax.experimental import pallas as pl
from jax.experimental.pallas import tpu as pltpu

_LANE = 128


def _mlp_kernel(x_ref, w1_ref, b1_ref, w2_ref, b2_ref, oT_ref):
    # x_ref: (TILE_B, 10).  Transpose on-chip so the batch sits on the lane
    # axis; all downstream intermediates are then lane-dense.
    xT = x_ref[...].T                                     # (10, TILE_B)
    # fc1: (5, 10) @ (10, TILE_B) + (5, 1) -> (5, TILE_B)
    h = jnp.dot(w1_ref[...], xT,
                preferred_element_type=jnp.float32,
                precision=jax.lax.Precision.HIGHEST)
    h = h + b1_ref[...]
    # Exact sigmoid: single EUP transcendental, no overflow path.
    h = 0.5 * jnp.tanh(0.5 * h) + 0.5
    # fc2: (2, 5) @ (5, TILE_B) + (2, 1) -> (2, TILE_B)
    out = jnp.dot(w2_ref[...], h,
                  preferred_element_type=jnp.float32,
                  precision=jax.lax.Precision.HIGHEST)
    out = out + b2_ref[...]
    oT_ref[...] = out.astype(oT_ref.dtype)


@functools.partial(jax.jit, static_argnames=("tile_b",))
def net_forward(x, w1, b1, w2, b2, *, tile_b=None):
    """Forward pass of Net.

    x : (B, 10) float32
    w1: (5, 10), b1: (5,)   -- PyTorch nn.Linear(10, 5) layout (out, in)
    w2: (2, 5),  b2: (2,)   -- PyTorch nn.Linear(5, 2)  layout (out, in)
    returns (B, 2) = fc2(sigmoid(fc1(x)))
    """
    B, f_in = x.shape
    f_hid, _ = w1.shape
    f_out, _ = w2.shape

    # --- batch-tile selection -------------------------------------------
    # Default 16K rows (~0.65 MB of real input per step) amortizes the
    # ~0.35 us per-grid-step overhead; 32K cap keeps the lane-padded
    # (TILE_B, 128) double-buffered input block VMEM-safe on all generations.
    if tile_b is None:
        tile_b = 16 * 1024
    tile_b = max(_LANE, min(int(tile_b), 32 * 1024))
    tile_b = (tile_b // _LANE) * _LANE
    b_up = pl.cdiv(B, _LANE) * _LANE
    tile_b = min(tile_b, b_up)                # don't over-allocate small batches
    # Keep >= 2 "parallel" grid steps when the batch allows it (v7x megacore).
    if b_up >= 2 * _LANE:
        tile_b = min(tile_b, pl.cdiv(b_up // 2, _LANE) * _LANE)
    n_tiles = pl.cdiv(B, tile_b)

    b1c = b1.reshape(f_hid, 1)
    b2c = b2.reshape(f_out, 1)

    # Weights/biases: full blocks, constant index_map -> resident in VMEM.
    def resident(arr):
        return pl.BlockSpec(arr.shape, lambda i: (0,) * arr.ndim)

    # VMEM budget: the (tile_b, 10) input block is lane-padded to 128
    # (~512 B/row, double-buffered); the (2, tile_b) output block is small.
    vmem_bytes = (2 * tile_b * _LANE * 4      # x blocks (lane-padded), x2 buffers
                  + 2 * 8 * tile_b * 4        # output blocks, x2 buffers
                  + tile_b * 256              # xT / h intermediates
                  + (2 << 20))                # headroom
    # TODO(synk): for tiny serving batches (tile_b <= ~1K) a deeper
    # pipeline_mode=pl.Buffered(3) on the x spec would hide DMA latency.

    outT = pl.pallas_call(
        _mlp_kernel,
        out_shape=jax.ShapeDtypeStruct((f_out, B), x.dtype),
        grid=(n_tiles,),
        in_specs=[
            pl.BlockSpec((tile_b, f_in), lambda i: (i, 0)),   # x, streamed
            resident(w1),
            resident(b1c),
            resident(w2),
            resident(b2c),
        ],
        out_specs=pl.BlockSpec((f_out, tile_b), lambda i: (0, i)),
        compiler_params=pltpu.CompilerParams(
            dimension_semantics=("parallel",),
            vmem_limit_bytes=max(32 << 20, vmem_bytes),
        ),
    )(x, w1, b1c, w2, b2c)

    # Tiny epilogue: (2, B) -> (B, 2).  Kept outside the kernel so the
    # in-kernel store stays lane-dense (see header comment).
    return outT.T


def init_params(key):
    """PyTorch-default-style init; weights in PyTorch (out, in) layout."""
    k1, k2, k3, k4 = jax.random.split(key, 4)
    lim1 = 1.0 / jnp.sqrt(10.0)
    lim2 = 1.0 / jnp.sqrt(5.0)
    w1 = jax.random.uniform(k1, (5, 10), jnp.float32, -lim1, lim1)
    b1 = jax.random.uniform(k2, (5,), jnp.float32, -lim1, lim1)
    w2 = jax.random.uniform(k3, (2, 5), jnp.float32, -lim2, lim2)
    b2 = jax.random.uniform(k4, (2,), jnp.float32, -lim2, lim2)
    return w1, b1, w2, b2


if __name__ == "__main__":
    key = jax.random.PRNGKey(0)
    kx, kp = jax.random.split(key)

    # Small test: B deliberately not a multiple of 128 to exercise the ragged
    # last block (masked writes) and the >=2-step "parallel" grid.
    B = 300
    x = jax.random.normal(kx, (B, 10), jnp.float32)
    w1, b1, w2, b2 = init_params(kp)

    out = net_forward(x, w1, b1, w2, b2)
    out = jax.block_until_ready(out)

    # Reference in plain JAX (same HIGHEST-precision matmuls, exact sigmoid).
    hp = jax.lax.Precision.HIGHEST
    ref = jnp.dot(jax.nn.sigmoid(jnp.dot(x, w1.T, precision=hp) + b1),
                  w2.T, precision=hp) + b2

    assert out.shape == (B, 2)
    max_err = float(jnp.max(jnp.abs(out - ref)))
    assert jnp.allclose(out, ref, atol=1e-4, rtol=1e-4), max_err

    print("KERNEL_OK")
</pallas_src>

<mosaic_0001>
module attributes {stable_mosaic.version = 11 : i64} {
  func.func @_mlp_kernel(%arg0: i32, %arg1: memref<256x10xf32, #tpu.memory_space<vmem>>, %arg2: memref<5x10xf32, #tpu.memory_space<vmem>>, %arg3: memref<5x1xf32, #tpu.memory_space<vmem>>, %arg4: memref<2x5xf32, #tpu.memory_space<vmem>>, %arg5: memref<2x1xf32, #tpu.memory_space<vmem>>, %arg6: memref<2x256xf32, #tpu.memory_space<vmem>>) attributes {dimension_semantics = [#tpu.dimension_semantics<parallel>], iteration_bounds = array<i64: 2>, scalar_prefetch = 0 : i64, scratch_operands = 0 : i64, tpu.core_type = #tpu.core_type<tc>, window_params = [{transform_indices = @transform_0, window_bounds = array<i64: 256, 10>}, {pipeline_mode = #tpu.pipeline_mode<synchronous>, transform_indices = @transform_1, window_bounds = array<i64: 5, 10>}, {pipeline_mode = #tpu.pipeline_mode<synchronous>, transform_indices = @transform_2, window_bounds = array<i64: 5, 1>}, {pipeline_mode = #tpu.pipeline_mode<synchronous>, transform_indices = @transform_3, window_bounds = array<i64: 2, 5>}, {pipeline_mode = #tpu.pipeline_mode<synchronous>, transform_indices = @transform_4, window_bounds = array<i64: 2, 1>}, {transform_indices = @transform_5, window_bounds = array<i64: 2, 256>}]} {
    %c0 = arith.constant 0 : index
    %c0_0 = arith.constant 0 : index
    %0 = vector.load %arg1[%c0, %c0_0] : memref<256x10xf32, #tpu.memory_space<vmem>>, vector<256x10xf32>
    %1 = tpu.transpose %0, [1, 0] : vector<256x10xf32> -> vector<10x256xf32>
    %c0_1 = arith.constant 0 : index
    %c0_2 = arith.constant 0 : index
    %2 = vector.load %arg2[%c0_1, %c0_2] : memref<5x10xf32, #tpu.memory_space<vmem>>, vector<5x10xf32>
    %cst = arith.constant dense<0.000000e+00> : vector<5x256xf32>
    %3 = tpu.matmul %2, %1, %cst {dimension_numbers = #tpu.dot_dimension_numbers<[1], [0], [0], [1], [0, 0, 1, 1], [], []>, precision = #tpu.contract_precision<fp32>} : vector<5x10xf32>, vector<10x256xf32>, vector<5x256xf32> -> vector<5x256xf32>
    %c0_3 = arith.constant 0 : index
    %c0_4 = arith.constant 0 : index
    %4 = vector.load %arg3[%c0_3, %c0_4] : memref<5x1xf32, #tpu.memory_space<vmem>>, vector<5x1xf32>
    %5 = vector.broadcast %4 : vector<5x1xf32> to vector<5x256xf32>
    %6 = arith.addf %3, %5 : vector<5x256xf32>
    %cst_5 = arith.constant 5.000000e-01 : f32
    %7 = vector.broadcast %cst_5 : f32 to vector<5x256xf32>
    %8 = arith.mulf %7, %6 : vector<5x256xf32>
    %9 = math.tanh %8 : vector<5x256xf32>
    %cst_6 = arith.constant 5.000000e-01 : f32
    %10 = vector.broadcast %cst_6 : f32 to vector<5x256xf32>
    %11 = arith.mulf %10, %9 : vector<5x256xf32>
    %cst_7 = arith.constant 5.000000e-01 : f32
    %12 = vector.broadcast %cst_7 : f32 to vector<5x256xf32>
    %13 = arith.addf %11, %12 : vector<5x256xf32>
    %c0_8 = arith.constant 0 : index
    %c0_9 = arith.constant 0 : index
    %14 = vector.load %arg4[%c0_8, %c0_9] : memref<2x5xf32, #tpu.memory_space<vmem>>, vector<2x5xf32>
    %cst_10 = arith.constant dense<0.000000e+00> : vector<2x256xf32>
    %15 = tpu.matmul %14, %13, %cst_10 {dimension_numbers = #tpu.dot_dimension_numbers<[1], [0], [0], [1], [0, 0, 1, 1], [], []>, precision = #tpu.contract_precision<fp32>} : vector<2x5xf32>, vector<5x256xf32>, vector<2x256xf32> -> vector<2x256xf32>
    %c0_11 = arith.constant 0 : index
    %c0_12 = arith.constant 0 : index
    %16 = vector.load %arg5[%c0_11, %c0_12] : memref<2x1xf32, #tpu.memory_space<vmem>>, vector<2x1xf32>
    %17 = vector.broadcast %16 : vector<2x1xf32> to vector<2x256xf32>
    %18 = arith.addf %15, %17 : vector<2x256xf32>
    %c0_13 = arith.constant 0 : index
    %c0_14 = arith.constant 0 : index
    %19 = vector.load %arg6[%c0_13, %c0_14] : memref<2x256xf32, #tpu.memory_space<vmem>>, vector<2x256xf32>
    tpu.vector_store %arg6[%c0_13, %c0_14], %18 {strides = array<i32>} : memref<2x256xf32, #tpu.memory_space<vmem>>, vector<2x256xf32>,
    return
  }
  func.func @transform_0(%arg0: i32) -> (i32, i32) {
    %c0_i32 = arith.constant 0 : i32
    %c0_i32_0 = arith.constant 0 : i32
    return %arg0, %c0_i32 : i32, i32
  }
  func.func @transform_1(%arg0: i32) -> (i32, i32) {
    %c0_i32 = arith.constant 0 : i32
    %c0_i32_0 = arith.constant 0 : i32
    %c0_i32_1 = arith.constant 0 : i32
    return %c0_i32, %c0_i32_0 : i32, i32
  }
  func.func @transform_2(%arg0: i32) -> (i32, i32) {
    %c0_i32 = arith.constant 0 : i32
    %c0_i32_0 = arith.constant 0 : i32
    %c0_i32_1 = arith.constant 0 : i32
    return %c0_i32, %c0_i32_0 : i32, i32
  }
  func.func @transform_3(%arg0: i32) -> (i32, i32) {
    %c0_i32 = arith.constant 0 : i32
    %c0_i32_0 = arith.constant 0 : i32
    %c0_i32_1 = arith.constant 0 : i32
    return %c0_i32, %c0_i32_0 : i32, i32
  }
  func.func @transform_4(%arg0: i32) -> (i32, i32) {
    %c0_i32 = arith.constant 0 : i32
    %c0_i32_0 = arith.constant 0 : i32
    %c0_i32_1 = arith.constant 0 : i32
    return %c0_i32, %c0_i32_0 : i32, i32
  }
  func.func @transform_5(%arg0: i32) -> (i32, i32) {
    %c0_i32 = arith.constant 0 : i32
    %c0_i32_0 = arith.constant 0 : i32
    return %c0_i32, %arg0 : i32, i32
  }
}

</mosaic_0001>

<llo_original>
// kernel: net_forward.1
$region0: #{net_forward.1}
  #allocation0 [shape = 'u32[]', space=smem, size = 0x4, offset = 0x4, fixed_abs, tag = 'smem constant byte address 0x4 - core index']
  #allocation1 [shape = 'u32[72,128]{1,0:T(1,128)}', space=vmem, size = 0x9000, scoped, tag = 'internal scratch']
  %s0 = inlined_call_operand.vmem [shape: f32[300,10], index: 0, kind: input, shape index: {}]
  %s1 = inlined_call_operand.vmem [shape: f32[5,10], index: 1, kind: input, shape index: {}]
  %s2 = inlined_call_operand.vmem [shape: f32[5,1], index: 2, kind: input, shape index: {}]
  %s3 = inlined_call_operand.vmem [shape: f32[2,5], index: 3, kind: input, shape index: {}]
  %s4 = inlined_call_operand.vmem [shape: f32[2,1], index: 4, kind: input, shape index: {}]
  %s5 = inlined_call_operand.hbm [shape: f32[2,300], index: 5, kind: output, shape index: {}]
  %s6 = sld [smem:[#allocation0]]
  $region53: #{net_forward.1} parent=0
    _
  %s8 = ssub.s32 1, %s6
  %s9 = scalar_select 0, %s8, %s6
  $region1: #{net_forward.1} parent=0
    #allocation2 [shape = 'u8[4096]{0}', space=vmem, size = 0x1000, scoped, tag = 'output window, operand 0']
    #allocation3 [shape = 's32[2]{0}', space=sflag, size = 0x8, scoped, tag = 'scoped memory for net_forward.1']
    %10 = vsyncpa [#allocation3], 0
    %s11 = scalar_lea.sflag [#allocation3], 1
    %12 = vsyncpa %s11, 0
    loop: start=0, step=1, limit=4
    $region2: #{net_forward.1} parent=1 // loop_pre_header
      _
    $region3: #{net_forward.1} parent=1 // loop_header
      %s14 = sphi 0, %s18
      %p15 = scmp.ge.s32.totalorder %s14, 4
      %s24 = sphi 0, %s26
      %s27 = sphi 0, %s24
      %s28 = sphi 0, %s27
      %s44 = sphi 0, %s28
      %s48 = sphi 0, %s48
      %s50 = sphi 0, %s48
      %s51 = sphi 0, %s50
      %s65 = sphi 0, %s51
      %s69 = sphi 0, %s69
      %s71 = sphi 0, %s69
      %s72 = sphi 0, %s71
      %s86 = sphi 0, %s72
      %s90 = sphi 0, %s90
      %s92 = sphi 0, %s90
      %s93 = sphi 0, %s92
      %s107 = sphi 0, %s93
      %s111 = sphi 0, %s111
      %s113 = sphi 0, %s111
      %s114 = sphi 0, %s113
      %s128 = sphi 0, %s114
      %s134 = sphi 0, %s136
      %s137 = sphi 0, %s134
      %s138 = sphi 0, %s137
      %s154 = sphi 0, %s138
    $region4: #{net_forward.1} parent=1 // loop_header_branch
      %17 = sbr.rel (%p15) target = $region8
    $region5: #{net_forward.1} parent=1 // loop_body
      %s19 = ssub.s32 %s14, 1
      %s20 = ssub.s32 %s14, 2
      %s21 = sadd.s32 %s14, 1
      %s22 = ssub.s32 %s14, %s21
      %p23 = scmp.eq.s32.totalorder %s22, 0
      %s25 = sadd.s32 %s24, 1
      %s26 = scalar_select %p23, %s24, %s25
      %p29 = pneg %p23
      %p30 = scmp.eq.s32.totalorder %s14, 1
      %p31 = por %p29, %p30
      %p32 = scmp.ne.s32.totalorder %s24, %s27
      %p33 = scmp.eq.s32.totalorder %s14, 0
      %p34 = por %p32, %p33
      %p35 = scmp.ne.s32.totalorder %s24, %s27
      %p36 = scmp.eq.s32.totalorder %s19, 1
      %p37 = por %p35, %p36
      %p38 = scmp.ne.s32.totalorder %s27, %s28
      %p39 = scmp.eq.s32.totalorder %s19, 0
      %p40 = por %p38, %p39
      %p41 = scmp.ne.s32.totalorder %s27, %s28
      %p42 = scmp.eq.s32.totalorder %s20, 1
      %p43 = por %p41, %p42
      %p45 = scmp.ne.s32.totalorder %s28, %s44
      %p46 = scmp.eq.s32.totalorder %s20, 0
      %p47 = por %p45, %p46
      %s49 = sadd.s32 %s48, 1
      %p52 = scmp.eq.s32.totalorder %s14, 1
      %p53 = scmp.ne.s32.totalorder %s48, %s50
      %p54 = scmp.eq.s32.totalorder %s14, 0
      %p55 = por %p53, %p54
      %p56 = scmp.ne.s32.totalorder %s48, %s50
      %p57 = scmp.eq.s32.totalorder %s19, 1
      %p58 = por %p56, %p57
      %p59 = scmp.ne.s32.totalorder %s50, %s51
      %p60 = scmp.eq.s32.totalorder %s19, 0
      %p61 = por %p59, %p60
      %p62 = scmp.ne.s32.totalorder %s50, %s51
      %p63 = scmp.eq.s32.totalorder %s20, 1
      %p64 = por %p62, %p63
      %p66 = scmp.ne.s32.totalorder %s51, %s65
      %p67 = scmp.eq.s32.totalorder %s20, 0
      %p68 = por %p66, %p67
      %s70 = sadd.s32 %s69, 1
      %p73 = scmp.eq.s32.totalorder %s14, 1
      %p74 = scmp.ne.s32.totalorder %s69, %s71
      %p75 = scmp.eq.s32.totalorder %s14, 0
      %p76 = por %p74, %p75
      %p77 = scmp.ne.s32.totalorder %s69, %s71
      %p78 = scmp.eq.s32.totalorder %s19, 1
      %p79 = por %p77, %p78
      %p80 = scmp.ne.s32.totalorder %s71, %s72
      %p81 = scmp.eq.s32.totalorder %s19, 0
      %p82 = por %p80, %p81
      %p83 = scmp.ne.s32.totalorder %s71, %s72
      %p84 = scmp.eq.s32.totalorder %s20, 1
      %p85 = por %p83, %p84
      %p87 = scmp.ne.s32.totalorder %s72, %s86
      %p88 = scmp.eq.s32.totalorder %s20, 0
      %p89 = por %p87, %p88
      %s91 = sadd.s32 %s90, 1
      %p94 = scmp.eq.s32.totalorder %s14, 1
      %p95 = scmp.ne.s32.totalorder %s90, %s92
      %p96 = scmp.eq.s32.totalorder %s14, 0
      %p97 = por %p95, %p96
      %p98 = scmp.ne.s32.totalorder %s90, %s92
      %p99 = scmp.eq.s32.totalorder %s19, 1
      %p100 = por %p98, %p99
      %p101 = scmp.ne.s32.totalorder %s92, %s93
      %p102 = scmp.eq.s32.totalorder %s19, 0
      %p103 = por %p101, %p102
      %p104 = scmp.ne.s32.totalorder %s92, %s93
      %p105 = scmp.eq.s32.totalorder %s20, 1
      %p106 = por %p104, %p105
      %p108 = scmp.ne.s32.totalorder %s93, %s107
      %p109 = scmp.eq.s32.totalorder %s20, 0
      %p110 = por %p108, %p109
      %s112 = sadd.s32 %s111, 1
      %p115 = scmp.eq.s32.totalorder %s14, 1
      %p116 = scmp.ne.s32.totalorder %s111, %s113
      %p117 = scmp.eq.s32.totalorder %s14, 0
      %p118 = por %p116, %p117
      %p119 = scmp.ne.s32.totalorder %s111, %s113
      %p120 = scmp.eq.s32.totalorder %s19, 1
      %p121 = por %p119, %p120
      %p122 = scmp.ne.s32.totalorder %s113, %s114
      %p123 = scmp.eq.s32.totalorder %s19, 0
      %p124 = por %p122, %p123
      %p125 = scmp.ne.s32.totalorder %s113, %s114
      %p126 = scmp.eq.s32.totalorder %s20, 1
      %p127 = por %p125, %p126
      %p129 = scmp.ne.s32.totalorder %s114, %s128
      %p130 = scmp.eq.s32.totalorder %s20, 0
      %p131 = por %p129, %p130
      %s132 = ssub.s32 %s14, %s21
      %p133 = scmp.eq.s32.totalorder %s132, 0
      %s135 = sadd.s32 %s134, 1
      %s136 = scalar_select %p133, %s134, %s135
      %p139 = pneg %p133
      %p140 = scmp.eq.s32.totalorder %s14, 1
      %p141 = por %p139, %p140
      %p142 = scmp.ne.s32.totalorder %s134, %s137
      %p143 = scmp.eq.s32.totalorder %s14, 0
      %p144 = por %p142, %p143
      %p145 = scmp.ne.s32.totalorder %s134, %s137
      %p146 = scmp.eq.s32.totalorder %s19, 1
      %p147 = por %p145, %p146
      %p148 = scmp.ne.s32.totalorder %s137, %s138
      %p149 = scmp.eq.s32.totalorder %s19, 0
      %p150 = por %p148, %p149
      %p151 = scmp.ne.s32.totalorder %s137, %s138
      %p152 = scmp.eq.s32.totalorder %s20, 1
      %p153 = por %p151, %p152
      %p155 = scmp.ne.s32.totalorder %s138, %s154
      %p156 = scmp.eq.s32.totalorder %s20, 0
      %p157 = por %p155, %p156
      %p158 = scmp.le.s32.totalorder 1, %s14
      %p159 = scmp.lt.s32.totalorder %s14, 3
      %p160 = pnand %p158, %p159
      %p161 = pneg %p160
      // Predicated region
      $region9: #{net_forward.1} parent=5 // pred_check
        _
      $region10: #{net_forward.1} parent=5 // pred_check_branch
        %163 = sbr.rel (%p160) target = $region12
      $region11: #{net_forward.1} parent=5 // pred_region
        %s164 = ssub.s32 %s14, 1
        // Predicated region
        $region13: #{net_forward.1} parent=11 // pred_check
          %p165 = pneg %p61
        $region14: #{net_forward.1} parent=11 // pred_check_branch
          %167 = sbr.rel (%p165) target = $region16
        $region15: #{net_forward.1} parent=11 // pred_region
          _
        $region16: #{net_forward.1} parent=11 // pred_fallthru
          _
        // Predicated region
        $region17: #{net_forward.1} parent=11 // pred_check
          %p168 = pneg %p82
        $region18: #{net_forward.1} parent=11 // pred_check_branch
          %170 = sbr.rel (%p168) target = $region20
        $region19: #{net_forward.1} parent=11 // pred_region
          _
        $region20: #{net_forward.1} parent=11 // pred_fallthru
          _
        // Predicated region
        $region21: #{net_forward.1} parent=11 // pred_check
          %p171 = pneg %p103
        $region22: #{net_forward.1} parent=11 // pred_check_branch
          %173 = sbr.rel (%p171) target = $region24
        $region23: #{net_forward.1} parent=11 // pred_region
          _
        $region24: #{net_forward.1} parent=11 // pred_fallthru
          _
        // Predicated region
        $region25: #{net_forward.1} parent=11 // pred_check
          %p174 = pneg %p124
        $region26: #{net_forward.1} parent=11 // pred_check_branch
          %176 = sbr.rel (%p174) target = $region28
        $region27: #{net_forward.1} parent=11 // pred_region
          _
        $region28: #{net_forward.1} parent=11 // pred_fallthru
          _
      $region12: #{net_forward.1} parent=5 // pred_fallthru
        _
      %p177 = scmp.lt.s32.totalorder %s14, 2
      // Predicated region
      $region29: #{net_forward.1} parent=5 // pred_check
        %p178 = pneg %p177
      $region30: #{net_forward.1} parent=5 // pred_check_branch
        %180 = sbr.rel (%p178) target = $region32
      $region31: #{net_forward.1} parent=5 // pred_region
        // Predicated region
        $region33: #{net_forward.1} parent=31 // pred_check
          %p181 = pneg %p34
        $region34: #{net_forward.1} parent=31 // pred_check_branch
          %183 = sbr.rel (%p181) target = $region36
        $region35: #{net_forward.1} parent=31 // pred_region
          %s184 = smul.u32 32, %s14
          %s185 = ssub.s32 38, %s184
          %p186 = scmp.lt.s32.totalorder %s185, 32
          %s187 = scalar_select %p186, %s185, 32
          %s188 = smul.u32 8, %s187
          %p189 = scmp.lt.s32.totalorder %s184, 37
          %s190 = scalar_select %p189, %s184, 37
          %s191 = smul.addr %s190, 8
          %s192 = scalar_lea.vmem %s0, %s191
          %s193 = smul.u32 32, %s14
          %s194 = ssub.s32 38, %s193
          %p195 = scmp.lt.s32.totalorder %s194, 32
          %s196 = scalar_select %p195, %s194, 32
          %s197 = smul.u32 8, %s196
        $region36: #{net_forward.1} parent=31 // pred_fallthru
          _
      $region32: #{net_forward.1} parent=5 // pred_fallthru
        _
      %p198 = scmp.le.s32.totalorder 1, %s14
      %p199 = scmp.lt.s32.totalorder %s14, 3
      %p200 = pnand %p198, %p199
      %p201 = pneg %p200
      // Predicated region
      $region37: #{net_forward.1} parent=5 // pred_check
        _
      $region38: #{net_forward.1} parent=5 // pred_check_branch
        %203 = sbr.rel (%p200) target = $region40
      $region39: #{net_forward.1} parent=5 // pred_region
        %s204 = ssub.s32 %s14, 1
        %s205 = smul.u32 32, %s19
        %s206 = ssub.s32 38, %s205
        %p207 = scmp.lt.s32.totalorder %s206, 32
        %s208 = scalar_select %p207, %s206, 32
        %s209 = smul.u32 8, %s208
        %p210 = scmp.lt.s32.totalorder %s205, 37
        %s211 = scalar_select %p210, %s205, 37
        %s212 = smul.addr %s211, 8
        %s213 = scalar_lea.vmem %s0, %s212
        %p214 = pneg %p40
        %p215 = pneg %p37
        %p216 = pneg %p61
        %p217 = pneg %p58
        %p218 = pneg %p82
        %p219 = pneg %p79
        %p220 = pneg %p103
        %p221 = pneg %p100
        %p222 = pneg %p124
        %p223 = pneg %p121
        %p224 = pneg %p150
        %p225 = pneg %p147
        %s226 = sand.u32 %s137, 1
        %s227 = scalar_lea.sflag [#allocation3], %s226
        %s228 = sand.u32 %s137, 1
        %s229 = smul.addr %s228, 4
        %s230 = scalar_lea.vmem [#allocation2], %s229
        %s231 = smul.u32 32, %s19
        %s232 = ssub.s32 38, %s231
        %p233 = scmp.lt.s32.totalorder %s232, 32
        %s234 = scalar_select %p233, %s232, 32
        %s235 = smul.u32 8, %s234
        %p236 = scmp.lt.s32.totalorder %s231, 37
        %s237 = scalar_select %p236, %s231, 37
        %s238 = smul.addr %s237, 8
        %s239 = scalar_lea.vmem %s0, %s238
        %s240 = smul.u32 32, %s19
        %s241 = ssub.s32 38, %s240
        %p242 = scmp.lt.s32.totalorder %s241, 32
        %s243 = scalar_select %p242, %s241, 32
        %s244 = smul.u32 8, %s243
        %s245 = smul.u32 2, %s19
        %s246 = ssub.s32 3, %s245
        %p247 = scmp.lt.s32.totalorder %s246, 2
        %s248 = scalar_select %p247, %s246, 2
        %s249 = smul.u32 2, %s248
        %v250 = vld [vmem:[%s239] sm:$0xff]
        %v251 = vld [vmem:[%s239 + $0x8] sm:$0xff]
        %v252 = vld [vmem:[%s239 + $0x10] sm:$0xff]
        %v253 = vld [vmem:[%s239 + $0x18] sm:$0xff]
        %v254 = vld [vmem:[%s239 + $0x20] sm:$0xff]
        %v255 = vld [vmem:[%s239 + $0x28] sm:$0xff]
        %v256 = vld [vmem:[%s239 + $0x30] sm:$0xff]
        %v257 = vld [vmem:[%s239 + $0x38] sm:$0xff]
        %v258 = vld [vmem:[%s239 + $0x40] sm:$0xff]
        %v259 = vld [vmem:[%s239 + $0x48] sm:$0xff]
        %v260 = vld [vmem:[%s239 + $0x50] sm:$0xff]
        %v261 = vld [vmem:[%s239 + $0x58] sm:$0xff]
        %v262 = vld [vmem:[%s239 + $0x60] sm:$0xff]
        %v263 = vld [vmem:[%s239 + $0x68] sm:$0xff]
        %v264 = vld [vmem:[%s239 + $0x70] sm:$0xff]
        %v265 = vld [vmem:[%s239 + $0x78] sm:$0xff]
        %v266 = vld [vmem:[%s239 + $0x80] sm:$0xff]
        %v267 = vld [vmem:[%s239 + $0x88] sm:$0xff]
        %v268 = vld [vmem:[%s239 + $0x90] sm:$0xff]
        %v269 = vld [vmem:[%s239 + $0x98] sm:$0xff]
        %v270 = vld [vmem:[%s239 + $0xa0] sm:$0xff]
        %v271 = vld [vmem:[%s239 + $0xa8] sm:$0xff]
        %v272 = vld [vmem:[%s239 + $0xb0] sm:$0xff]
        %v273 = vld [vmem:[%s239 + $0xb8] sm:$0xff]
        %v274 = vld [vmem:[%s239 + $0xc0] sm:$0xff]
        %v275 = vld [vmem:[%s239 + $0xc8] sm:$0xff]
        %v276 = vld [vmem:[%s239 + $0xd0] sm:$0xff]
        %v277 = vld [vmem:[%s239 + $0xd8] sm:$0xff]
        %v278 = vld [vmem:[%s239 + $0xe0] sm:$0xff]
        %v279 = vld [vmem:[%s239 + $0xe8] sm:$0xff]
        %v280 = vld [vmem:[%s239 + $0xf0] sm:$0xff]
        %v281 = vld [vmem:[%s239 + $0xf8] sm:$0xff]
        %v282 = vld [vmem:[%s1] sm:$0x1f]
        %v283 = vld [vmem:[%s2] sm:$0x1f]
        %285 = vset.pattern.permute.xlu0 0
        %286 = vperm.xlu0 %285, %v283
        %v287 = vpop.permute.xlu0 %286
        %vm289 = vcmask 80896
        %v291 = vsel %vm289, %v282, 0
        %v294 = vsel %vm289, %v250, 0
        %v297 = vsel %vm289, %v251, 0
        %v300 = vsel %vm289, %v252, 0
        %v303 = vsel %vm289, %v253, 0
        %v306 = vsel %vm289, %v254, 0
        %v309 = vsel %vm289, %v255, 0
        %v312 = vsel %vm289, %v256, 0
        %v315 = vsel %vm289, %v257, 0
        %v318 = vsel %vm289, %v258, 0
        %v321 = vsel %vm289, %v259, 0
        %v324 = vsel %vm289, %v260, 0
        %v327 = vsel %vm289, %v261, 0
        %v330 = vsel %vm289, %v262, 0
        %v333 = vsel %vm289, %v263, 0
        %v336 = vsel %vm289, %v264, 0
        %v339 = vsel %vm289, %v265, 0
        %v342 = vsel %vm289, %v266, 0
        %v345 = vsel %vm289, %v267, 0
        %v348 = vsel %vm289, %v268, 0
        %v351 = vsel %vm289, %v269, 0
        %v354 = vsel %vm289, %v270, 0
        %v357 = vsel %vm289, %v271, 0
        %v360 = vsel %vm289, %v272, 0
        %v363 = vsel %vm289, %v273, 0
        %v366 = vsel %vm289, %v274, 0
        %v369 = vsel %vm289, %v275, 0
        %v372 = vsel %vm289, %v276, 0
        %v375 = vsel %vm289, %v277, 0
        %v378 = vsel %vm289, %v278, 0
        %v381 = vsel %vm289, %v279, 0
        %v384 = vsel %vm289, %v280, 0
        %v387 = vsel %vm289, %v281, 0
        %v389 = vand.u32 %v339, 4294901760
        %390 = vmatpush.xpose.msra.mxu0 %v389
        %v391 = vand.u32 %v336, 4294901760
        %392 = vmatpush.xpose.msra.mxu0 %v391
        %v393 = vand.u32 %v333, 4294901760
        %394 = vmatpush.xpose.msra.mxu0 %v393
        %v395 = vand.u32 %v330, 4294901760
        %396 = vmatpush.xpose.msra.mxu0 %v395
        %v397 = vand.u32 %v327, 4294901760
        %398 = vmatpush.xpose.msra.mxu0 %v397
        %v399 = vand.u32 %v324, 4294901760
        %400 = vmatpush.xpose.msra.mxu0 %v399
        %v401 = vand.u32 %v321, 4294901760
        %402 = vmatpush.xpose.msra.mxu0 %v401
        %v403 = vand.u32 %v318, 4294901760
        %404 = vmatpush.xpose.msra.mxu0 %v403
        %v405 = vand.u32 %v315, 4294901760
        %406 = vmatpush.xpose.msra.mxu0 %v405
        %v407 = vand.u32 %v312, 4294901760
        %408 = vmatpush.xpose.msra.mxu0 %v407
        %v409 = vand.u32 %v309, 4294901760
        %410 = vmatpush.xpose.msra.mxu0 %v409
        %v411 = vand.u32 %v306, 4294901760
        %412 = vmatpush.xpose.msra.mxu0 %v411
        %v413 = vand.u32 %v303, 4294901760
        %414 = vmatpush.xpose.msra.mxu0 %v413
        %v415 = vand.u32 %v300, 4294901760
        %416 = vmatpush.xpose.msra.mxu0 %v415
        %v417 = vand.u32 %v297, 4294901760
        %418 = vmatpush.xpose.msra.mxu0 %v417
        %v419 = vand.u32 %v294, 4294901760
        %420 = vmatpush.xpose.msra.mxu0 %v419
        %v421 = vand.u32 %v291, 4294901760
        %v422 = vsub.f32 %v291, %v421
        %v423 = vand.u32 %v422, 4294901760
        %v424 = vsub.f32 %v422, %v423
        %v425 = vand.u32 %v424, 4294901760
        %426 = vmatmul.f32.gmra.mxu0 %v425
        %v427 = vpop.f32.mrf.mxu0
        %v428 = vadd.f32 %v287, %v427
        %429 = vdwg.mxu0
        %v430 = vand.u32 %v339, 4294901760
        %v431 = vsub.f32 %v339, %v430
        %v432 = vand.u32 %v431, 4294901760
        %v433 = vsub.f32 %v431, %v432
        %v434 = vand.u32 %v433, 4294901760
        %435 = vmatpush.xpose.msra.mxu0 %v434
        %v436 = vand.u32 %v336, 4294901760
        %v437 = vsub.f32 %v336, %v436
        %v438 = vand.u32 %v437, 4294901760
        %v439 = vsub.f32 %v437, %v438
        %v440 = vand.u32 %v439, 4294901760
        %441 = vmatpush.xpose.msra.mxu0 %v440
        %v442 = vand.u32 %v333, 4294901760
        %v443 = vsub.f32 %v333, %v442
        %v444 = vand.u32 %v443, 4294901760
        %v445 = vsub.f32 %v443, %v444
        %v446 = vand.u32 %v445, 4294901760
        %447 = vmatpush.xpose.msra.mxu0 %v446
        %v448 = vand.u32 %v330, 4294901760
        %v449 = vsub.f32 %v330, %v448
        %v450 = vand.u32 %v449, 4294901760
        %v451 = vsub.f32 %v449, %v450
        %v452 = vand.u32 %v451, 4294901760
        %453 = vmatpush.xpose.msra.mxu0 %v452
        %v454 = vand.u32 %v327, 4294901760
        %v455 = vsub.f32 %v327, %v454
        %v456 = vand.u32 %v455, 4294901760
        %v457 = vsub.f32 %v455, %v456
        %v458 = vand.u32 %v457, 4294901760
        %459 = vmatpush.xpose.msra.mxu0 %v458
        %v460 = vand.u32 %v324, 4294901760
        %v461 = vsub.f32 %v324, %v460
        %v462 = vand.u32 %v461, 4294901760
        %v463 = vsub.f32 %v461, %v462
        %v464 = vand.u32 %v463, 4294901760
        %465 = vmatpush.xpose.msra.mxu0 %v464
        %v466 = vand.u32 %v321, 4294901760
        %v467 = vsub.f32 %v321, %v466
        %v468 = vand.u32 %v467, 4294901760
        %v469 = vsub.f32 %v467, %v468
        %v470 = vand.u32 %v469, 4294901760
        %471 = vmatpush.xpose.msra.mxu0 %v470
        %v472 = vand.u32 %v318, 4294901760
        %v473 = vsub.f32 %v318, %v472
        %v474 = vand.u32 %v473, 4294901760
        %v475 = vsub.f32 %v473, %v474
        %v476 = vand.u32 %v475, 4294901760
        %477 = vmatpush.xpose.msra.mxu0 %v476
        %v478 = vand.u32 %v315, 4294901760
        %v479 = vsub.f32 %v315, %v478
        %v480 = vand.u32 %v479, 4294901760
        %v481 = vsub.f32 %v479, %v480
        %v482 = vand.u32 %v481, 4294901760
        %483 = vmatpush.xpose.msra.mxu0 %v482
        %v484 = vand.u32 %v312, 4294901760
        %v485 = vsub.f32 %v312, %v484
        %v486 = vand.u32 %v485, 4294901760
        %v487 = vsub.f32 %v485, %v486
        %v488 = vand.u32 %v487, 4294901760
        %489 = vmatpush.xpose.msra.mxu0 %v488
        %v490 = vand.u32 %v309, 4294901760
        %v491 = vsub.f32 %v309, %v490
        %v492 = vand.u32 %v491, 4294901760
        %v493 = vsub.f32 %v491, %v492
        %v494 = vand.u32 %v493, 4294901760
        %495 = vmatpush.xpose.msra.mxu0 %v494
        %v496 = vand.u32 %v306, 4294901760
        %v497 = vsub.f32 %v306, %v496
        %v498 = vand.u32 %v497, 4294901760
        %v499 = vsub.f32 %v497, %v498
        %v500 = vand.u32 %v499, 4294901760
        %501 = vmatpush.xpose.msra.mxu0 %v500
        %v502 = vand.u32 %v303, 4294901760
        %v503 = vsub.f32 %v303, %v502
        %v504 = vand.u32 %v503, 4294901760
        %v505 = vsub.f32 %v503, %v504
        %v506 = vand.u32 %v505, 4294901760
        %507 = vmatpush.xpose.msra.mxu0 %v506
        %v508 = vand.u32 %v300, 4294901760
        %v509 = vsub.f32 %v300, %v508
        %v510 = vand.u32 %v509, 4294901760
        %v511 = vsub.f32 %v509, %v510
        %v512 = vand.u32 %v511, 4294901760
        %513 = vmatpush.xpose.msra.mxu0 %v512
        %v514 = vand.u32 %v297, 4294901760
        %v515 = vsub.f32 %v297, %v514
        %v516 = vand.u32 %v515, 4294901760
        %v517 = vsub.f32 %v515, %v516
        %v518 = vand.u32 %v517, 4294901760
        %519 = vmatpush.xpose.msra.mxu0 %v518
        %v520 = vand.u32 %v294, 4294901760
        %v521 = vsub.f32 %v294, %v520
        %v522 = vand.u32 %v521, 4294901760
        %v523 = vsub.f32 %v521, %v522
        %v524 = vand.u32 %v523, 4294901760
        %525 = vmatpush.xpose.msra.mxu0 %v524
        %v526 = vand.u32 %v291, 4294901760
        %527 = vmatmul.f32.gmra.mxu0 %v526
        %v528 = vpop.f32.mrf.mxu0
        %v529 = vadd.f32 %v428, %v528
        %530 = vdwg.mxu0
        %v531 = vand.u32 %v339, 4294901760
        %v532 = vsub.f32 %v339, %v531
        %533 = vmatpush.xpose.msra.mxu0 %v532
        %v534 = vand.u32 %v336, 4294901760
        %v535 = vsub.f32 %v336, %v534
        %536 = vmatpush.xpose.msra.mxu0 %v535
        %v537 = vand.u32 %v333, 4294901760
        %v538 = vsub.f32 %v333, %v537
        %539 = vmatpush.xpose.msra.mxu0 %v538
        %v540 = vand.u32 %v330, 4294901760
        %v541 = vsub.f32 %v330, %v540
        %542 = vmatpush.xpose.msra.mxu0 %v541
        %v543 = vand.u32 %v327, 4294901760
        %v544 = vsub.f32 %v327, %v543
        %545 = vmatpush.xpose.msra.mxu0 %v544
        %v546 = vand.u32 %v324, 4294901760
        %v547 = vsub.f32 %v324, %v546
        %548 = vmatpush.xpose.msra.mxu0 %v547
        %v549 = vand.u32 %v321, 4294901760
        %v550 = vsub.f32 %v321, %v549
        %551 = vmatpush.xpose.msra.mxu0 %v550
        %v552 = vand.u32 %v318, 4294901760
        %v553 = vsub.f32 %v318, %v552
        %554 = vmatpush.xpose.msra.mxu0 %v553
        %v555 = vand.u32 %v315, 4294901760
        %v556 = vsub.f32 %v315, %v555
        %557 = vmatpush.xpose.msra.mxu0 %v556
        %v558 = vand.u32 %v312, 4294901760
        %v559 = vsub.f32 %v312, %v558
        %560 = vmatpush.xpose.msra.mxu0 %v559
        %v561 = vand.u32 %v309, 4294901760
        %v562 = vsub.f32 %v309, %v561
        %563 = vmatpush.xpose.msra.mxu0 %v562
        %v564 = vand.u32 %v306, 4294901760
        %v565 = vsub.f32 %v306, %v564
        %566 = vmatpush.xpose.msra.mxu0 %v565
        %v567 = vand.u32 %v303, 4294901760
        %v568 = vsub.f32 %v303, %v567
        %569 = vmatpush.xpose.msra.mxu0 %v568
        %v570 = vand.u32 %v300, 4294901760
        %v571 = vsub.f32 %v300, %v570
        %572 = vmatpush.xpose.msra.mxu0 %v571
        %v573 = vand.u32 %v297, 4294901760
        %v574 = vsub.f32 %v297, %v573
        %575 = vmatpush.xpose.msra.mxu0 %v574
        %v576 = vand.u32 %v294, 4294901760
        %v577 = vsub.f32 %v294, %v576
        %578 = vmatpush.xpose.msra.mxu0 %v577
        %v579 = vand.u32 %v291, 4294901760
        %v580 = vsub.f32 %v291, %v579
        %581 = vmatmul.f32.gmra.mxu0 %v580
        %v582 = vpop.f32.mrf.mxu0
        %v583 = vadd.f32 %v529, %v582
        %584 = vdwg.mxu0
        %v585 = vand.u32 %v339, 4294901760
        %586 = vmatpush.xpose.msra.mxu0 %v585
        %v587 = vand.u32 %v336, 4294901760
        %588 = vmatpush.xpose.msra.mxu0 %v587
        %v589 = vand.u32 %v333, 4294901760
        %590 = vmatpush.xpose.msra.mxu0 %v589
        %v591 = vand.u32 %v330, 4294901760
        %592 = vmatpush.xpose.msra.mxu0 %v591
        %v593 = vand.u32 %v327, 4294901760
        %594 = vmatpush.xpose.msra.mxu0 %v593
        %v595 = vand.u32 %v324, 4294901760
        %596 = vmatpush.xpose.msra.mxu0 %v595
        %v597 = vand.u32 %v321, 4294901760
        %598 = vmatpush.xpose.msra.mxu0 %v597
        %v599 = vand.u32 %v318, 4294901760
        %600 = vmatpush.xpose.msra.mxu0 %v599
        %v601 = vand.u32 %v315, 4294901760
        %602 = vmatpush.xpose.msra.mxu0 %v601
        %v603 = vand.u32 %v312, 4294901760
        %604 = vmatpush.xpose.msra.mxu0 %v603
        %v605 = vand.u32 %v309, 4294901760
        %606 = vmatpush.xpose.msra.mxu0 %v605
        %v607 = vand.u32 %v306, 4294901760
        %608 = vmatpush.xpose.msra.mxu0 %v607
        %v609 = vand.u32 %v303, 4294901760
        %610 = vmatpush.xpose.msra.mxu0 %v609
        %v611 = vand.u32 %v300, 4294901760
        %612 = vmatpush.xpose.msra.mxu0 %v611
        %v613 = vand.u32 %v297, 4294901760
        %614 = vmatpush.xpose.msra.mxu0 %v613
        %v615 = vand.u32 %v294, 4294901760
        %616 = vmatpush.xpose.msra.mxu0 %v615
        %v617 = vand.u32 %v291, 4294901760
        %v618 = vsub.f32 %v291, %v617
        %v619 = vand.u32 %v618, 4294901760
        %620 = vmatmul.f32.gmra.mxu0 %v619
        %v621 = vpop.f32.mrf.mxu0
        %v622 = vadd.f32 %v583, %v621
        %623 = vdwg.mxu0
        %v624 = vand.u32 %v339, 4294901760
        %v625 = vsub.f32 %v339, %v624
        %v626 = vand.u32 %v625, 4294901760
        %627 = vmatpush.xpose.msra.mxu0 %v626
        %v628 = vand.u32 %v336, 4294901760
        %v629 = vsub.f32 %v336, %v628
        %v630 = vand.u32 %v629, 4294901760
        %631 = vmatpush.xpose.msra.mxu0 %v630
        %v632 = vand.u32 %v333, 4294901760
        %v633 = vsub.f32 %v333, %v632
        %v634 = vand.u32 %v633, 4294901760
        %635 = vmatpush.xpose.msra.mxu0 %v634
        %v636 = vand.u32 %v330, 4294901760
        %v637 = vsub.f32 %v330, %v636
        %v638 = vand.u32 %v637, 4294901760
        %639 = vmatpush.xpose.msra.mxu0 %v638
        %v640 = vand.u32 %v327, 4294901760
        %v641 = vsub.f32 %v327, %v640
        %v642 = vand.u32 %v641, 4294901760
        %643 = vmatpush.xpose.msra.mxu0 %v642
        %v644 = vand.u32 %v324, 4294901760
        %v645 = vsub.f32 %v324, %v644
        %v646 = vand.u32 %v645, 4294901760
        %647 = vmatpush.xpose.msra.mxu0 %v646
        %v648 = vand.u32 %v321, 4294901760
        %v649 = vsub.f32 %v321, %v648
        %v650 = vand.u32 %v649, 4294901760
        %651 = vmatpush.xpose.msra.mxu0 %v650
        %v652 = vand.u32 %v318, 4294901760
        %v653 = vsub.f32 %v318, %v652
        %v654 = vand.u32 %v653, 4294901760
        %655 = vmatpush.xpose.msra.mxu0 %v654
        %v656 = vand.u32 %v315, 4294901760
        %v657 = vsub.f32 %v315, %v656
        %v658 = vand.u32 %v657, 4294901760
        %659 = vmatpush.xpose.msra.mxu0 %v658
        %v660 = vand.u32 %v312, 4294901760
        %v661 = vsub.f32 %v312, %v660
        %v662 = vand.u32 %v661, 4294901760
        %663 = vmatpush.xpose.msra.mxu0 %v662
        %v664 = vand.u32 %v309, 4294901760
        %v665 = vsub.f32 %v309, %v664
        %v666 = vand.u32 %v665, 4294901760
        %667 = vmatpush.xpose.msra.mxu0 %v666
        %v668 = vand.u32 %v306, 4294901760
        %v669 = vsub.f32 %v306, %v668
        %v670 = vand.u32 %v669, 4294901760
        %671 = vmatpush.xpose.msra.mxu0 %v670
        %v672 = vand.u32 %v303, 4294901760
        %v673 = vsub.f32 %v303, %v672
        %v674 = vand.u32 %v673, 4294901760
        %675 = vmatpush.xpose.msra.mxu0 %v674
        %v676 = vand.u32 %v300, 4294901760
        %v677 = vsub.f32 %v300, %v676
        %v678 = vand.u32 %v677, 4294901760
        %679 = vmatpush.xpose.msra.mxu0 %v678
        %v680 = vand.u32 %v297, 4294901760
        %v681 = vsub.f32 %v297, %v680
        %v682 = vand.u32 %v681, 4294901760
        %683 = vmatpush.xpose.msra.mxu0 %v682
        %v684 = vand.u32 %v294, 4294901760
        %v685 = vsub.f32 %v294, %v684
        %v686 = vand.u32 %v685, 4294901760
        %687 = vmatpush.xpose.msra.mxu0 %v686
        %v688 = vand.u32 %v291, 4294901760
        %689 = vmatmul.f32.gmra.mxu0 %v688
        %v690 = vpop.f32.mrf.mxu0
        %v691 = vadd.f32 %v622, %v690
        %692 = vdwg.mxu0
        %v693 = vand.u32 %v339, 4294901760
        %694 = vmatpush.xpose.msra.mxu0 %v693
        %v695 = vand.u32 %v336, 4294901760
        %696 = vmatpush.xpose.msra.mxu0 %v695
        %v697 = vand.u32 %v333, 4294901760
        %698 = vmatpush.xpose.msra.mxu0 %v697
        %v699 = vand.u32 %v330, 4294901760
        %700 = vmatpush.xpose.msra.mxu0 %v699
        %v701 = vand.u32 %v327, 4294901760
        %702 = vmatpush.xpose.msra.mxu0 %v701
        %v703 = vand.u32 %v324, 4294901760
        %704 = vmatpush.xpose.msra.mxu0 %v703
        %v705 = vand.u32 %v321, 4294901760
        %706 = vmatpush.xpose.msra.mxu0 %v705
        %v707 = vand.u32 %v318, 4294901760
        %708 = vmatpush.xpose.msra.mxu0 %v707
        %v709 = vand.u32 %v315, 4294901760
        %710 = vmatpush.xpose.msra.mxu0 %v709
        %v711 = vand.u32 %v312, 4294901760
        %712 = vmatpush.xpose.msra.mxu0 %v711
        %v713 = vand.u32 %v309, 4294901760
        %714 = vmatpush.xpose.msra.mxu0 %v713
        %v715 = vand.u32 %v306, 4294901760
        %716 = vmatpush.xpose.msra.mxu0 %v715
        %v717 = vand.u32 %v303, 4294901760
        %718 = vmatpush.xpose.msra.mxu0 %v717
        %v719 = vand.u32 %v300, 4294901760
        %720 = vmatpush.xpose.msra.mxu0 %v719
        %v721 = vand.u32 %v297, 4294901760
        %722 = vmatpush.xpose.msra.mxu0 %v721
        %v723 = vand.u32 %v294, 4294901760
        %724 = vmatpush.xpose.msra.mxu0 %v723
        %v725 = vand.u32 %v291, 4294901760
        %726 = vmatmul.f32.gmra.mxu0 %v725
        %v727 = vpop.f32.mrf.mxu0
        %v728 = vadd.f32 %v691, %v727
        %729 = vdwg.mxu0
        %v730 = vand.u32 %v387, 4294901760
        %731 = vmatpush.xpose.msra.mxu0 %v730
        %v732 = vand.u32 %v384, 4294901760
        %733 = vmatpush.xpose.msra.mxu0 %v732
        %v734 = vand.u32 %v381, 4294901760
        %735 = vmatpush.xpose.msra.mxu0 %v734
        %v736 = vand.u32 %v378, 4294901760
        %737 = vmatpush.xpose.msra.mxu0 %v736
        %v738 = vand.u32 %v375, 4294901760
        %739 = vmatpush.xpose.msra.mxu0 %v738
        %v740 = vand.u32 %v372, 4294901760
        %741 = vmatpush.xpose.msra.mxu0 %v740
        %v742 = vand.u32 %v369, 4294901760
        %743 = vmatpush.xpose.msra.mxu0 %v742
        %v744 = vand.u32 %v366, 4294901760
        %745 = vmatpush.xpose.msra.mxu0 %v744
        %v746 = vand.u32 %v363, 4294901760
        %747 = vmatpush.xpose.msra.mxu0 %v746
        %v748 = vand.u32 %v360, 4294901760
        %749 = vmatpush.xpose.msra.mxu0 %v748
        %v750 = vand.u32 %v357, 4294901760
        %751 = vmatpush.xpose.msra.mxu0 %v750
        %v752 = vand.u32 %v354, 4294901760
        %753 = vmatpush.xpose.msra.mxu0 %v752
        %v754 = vand.u32 %v351, 4294901760
        %755 = vmatpush.xpose.msra.mxu0 %v754
        %v756 = vand.u32 %v348, 4294901760
        %757 = vmatpush.xpose.msra.mxu0 %v756
        %v758 = vand.u32 %v345, 4294901760
        %759 = vmatpush.xpose.msra.mxu0 %v758
        %v760 = vand.u32 %v342, 4294901760
        %761 = vmatpush.xpose.msra.mxu0 %v760
        %v762 = vand.u32 %v291, 4294901760
        %v763 = vsub.f32 %v291, %v762
        %v764 = vand.u32 %v763, 4294901760
        %v765 = vsub.f32 %v763, %v764
        %v766 = vand.u32 %v765, 4294901760
        %767 = vmatmul.f32.gmra.mxu0 %v766
        %v768 = vpop.f32.mrf.mxu0
        %v769 = vadd.f32 %v287, %v768
        %770 = vdwg.mxu0
        %v771 = vand.u32 %v387, 4294901760
        %v772 = vsub.f32 %v387, %v771
        %v773 = vand.u32 %v772, 4294901760
        %v774 = vsub.f32 %v772, %v773
        %v775 = vand.u32 %v774, 4294901760
        %776 = vmatpush.xpose.msra.mxu0 %v775
        %v777 = vand.u32 %v384, 4294901760
        %v778 = vsub.f32 %v384, %v777
        %v779 = vand.u32 %v778, 4294901760
        %v780 = vsub.f32 %v778, %v779
        %v781 = vand.u32 %v780, 4294901760
        %782 = vmatpush.xpose.msra.mxu0 %v781
        %v783 = vand.u32 %v381, 4294901760
        %v784 = vsub.f32 %v381, %v783
        %v785 = vand.u32 %v784, 4294901760
        %v786 = vsub.f32 %v784, %v785
        %v787 = vand.u32 %v786, 4294901760
        %788 = vmatpush.xpose.msra.mxu0 %v787
        %v789 = vand.u32 %v378, 4294901760
        %v790 = vsub.f32 %v378, %v789
        %v791 = vand.u32 %v790, 4294901760
        %v792 = vsub.f32 %v790, %v791
        %v793 = vand.u32 %v792, 4294901760
        %794 = vmatpush.xpose.msra.mxu0 %v793
        %v795 = vand.u32 %v375, 4294901760
        %v796 = vsub.f32 %v375, %v795
        %v797 = vand.u32 %v796, 4294901760
        %v798 = vsub.f32 %v796, %v797
        %v799 = vand.u32 %v798, 4294901760
        %800 = vmatpush.xpose.msra.mxu0 %v799
        %v801 = vand.u32 %v372, 4294901760
        %v802 = vsub.f32 %v372, %v801
        %v803 = vand.u32 %v802, 4294901760
        %v804 = vsub.f32 %v802, %v803
        %v805 = vand.u32 %v804, 4294901760
        %806 = vmatpush.xpose.msra.mxu0 %v805
        %v807 = vand.u32 %v369, 4294901760
        %v808 = vsub.f32 %v369, %v807
        %v809 = vand.u32 %v808, 4294901760
        %v810 = vsub.f32 %v808, %v809
        %v811 = vand.u32 %v810, 4294901760
        %812 = vmatpush.xpose.msra.mxu0 %v811
        %v813 = vand.u32 %v366, 4294901760
        %v814 = vsub.f32 %v366, %v813
        %v815 = vand.u32 %v814, 4294901760
        %v816 = vsub.f32 %v814, %v815
        %v817 = vand.u32 %v816, 4294901760
        %818 = vmatpush.xpose.msra.mxu0 %v817
        %v819 = vand.u32 %v363, 4294901760
        %v820 = vsub.f32 %v363, %v819
        %v821 = vand.u32 %v820, 4294901760
        %v822 = vsub.f32 %v820, %v821
        %v823 = vand.u32 %v822, 4294901760
        %824 = vmatpush.xpose.msra.mxu0 %v823
        %v825 = vand.u32 %v360, 4294901760
        %v826 = vsub.f32 %v360, %v825
        %v827 = vand.u32 %v826, 4294901760
        %v828 = vsub.f32 %v826, %v827
        %v829 = vand.u32 %v828, 4294901760
        %830 = vmatpush.xpose.msra.mxu0 %v829
        %v831 = vand.u32 %v357, 4294901760
        %v832 = vsub.f32 %v357, %v831
        %v833 = vand.u32 %v832, 4294901760
        %v834 = vsub.f32 %v832, %v833
        %v835 = vand.u32 %v834, 4294901760
        %836 = vmatpush.xpose.msra.mxu0 %v835
        %v837 = vand.u32 %v354, 4294901760
        %v838 = vsub.f32 %v354, %v837
        %v839 = vand.u32 %v838, 4294901760
        %v840 = vsub.f32 %v838, %v839
        %v841 = vand.u32 %v840, 4294901760
        %842 = vmatpush.xpose.msra.mxu0 %v841
        %v843 = vand.u32 %v351, 4294901760
        %v844 = vsub.f32 %v351, %v843
        %v845 = vand.u32 %v844, 4294901760
        %v846 = vsub.f32 %v844, %v845
        %v847 = vand.u32 %v846, 4294901760
        %848 = vmatpush.xpose.msra.mxu0 %v847
        %v849 = vand.u32 %v348, 4294901760
        %v850 = vsub.f32 %v348, %v849
        %v851 = vand.u32 %v850, 4294901760
        %v852 = vsub.f32 %v850, %v851
        %v853 = vand.u32 %v852, 4294901760
        %854 = vmatpush.xpose.msra.mxu0 %v853
        %v855 = vand.u32 %v345, 4294901760
        %v856 = vsub.f32 %v345, %v855
        %v857 = vand.u32 %v856, 4294901760
        %v858 = vsub.f32 %v856, %v857
        %v859 = vand.u32 %v858, 4294901760
        %860 = vmatpush.xpose.msra.mxu0 %v859
        %v861 = vand.u32 %v342, 4294901760
        %v862 = vsub.f32 %v342, %v861
        %v863 = vand.u32 %v862, 4294901760
        %v864 = vsub.f32 %v862, %v863
        %v865 = vand.u32 %v864, 4294901760
        %866 = vmatpush.xpose.msra.mxu0 %v865
        %v867 = vand.u32 %v291, 4294901760
        %868 = vmatmul.f32.gmra.mxu0 %v867
        %v869 = vpop.f32.mrf.mxu0
        %v870 = vadd.f32 %v769, %v869
        %871 = vdwg.mxu0
        %v872 = vand.u32 %v387, 4294901760
        %v873 = vsub.f32 %v387, %v872
        %874 = vmatpush.xpose.msra.mxu0 %v873
        %v875 = vand.u32 %v384, 4294901760
        %v876 = vsub.f32 %v384, %v875
        %877 = vmatpush.xpose.msra.mxu0 %v876
        %v878 = vand.u32 %v381, 4294901760
        %v879 = vsub.f32 %v381, %v878
        %880 = vmatpush.xpose.msra.mxu0 %v879
        %v881 = vand.u32 %v378, 4294901760
        %v882 = vsub.f32 %v378, %v881
        %883 = vmatpush.xpose.msra.mxu0 %v882
        %v884 = vand.u32 %v375, 4294901760
        %v885 = vsub.f32 %v375, %v884
        %886 = vmatpush.xpose.msra.mxu0 %v885
        %v887 = vand.u32 %v372, 4294901760
        %v888 = vsub.f32 %v372, %v887
        %889 = vmatpush.xpose.msra.mxu0 %v888
        %v890 = vand.u32 %v369, 4294901760
        %v891 = vsub.f32 %v369, %v890
        %892 = vmatpush.xpose.msra.mxu0 %v891
        %v893 = vand.u32 %v366, 4294901760
        %v894 = vsub.f32 %v366, %v893
        %895 = vmatpush.xpose.msra.mxu0 %v894
        %v896 = vand.u32 %v363, 4294901760
        %v897 = vsub.f32 %v363, %v896
        %898 = vmatpush.xpose.msra.mxu0 %v897
        %v899 = vand.u32 %v360, 4294901760
        %v900 = vsub.f32 %v360, %v899
        %901 = vmatpush.xpose.msra.mxu0 %v900
        %v902 = vand.u32 %v357, 4294901760
        %v903 = vsub.f32 %v357, %v902
        %904 = vmatpush.xpose.msra.mxu0 %v903
        %v905 = vand.u32 %v354, 4294901760
        %v906 = vsub.f32 %v354, %v905
        %907 = vmatpush.xpose.msra.mxu0 %v906
        %v908 = vand.u32 %v351, 4294901760
        %v909 = vsub.f32 %v351, %v908
        %910 = vmatpush.xpose.msra.mxu0 %v909
        %v911 = vand.u32 %v348, 4294901760
        %v912 = vsub.f32 %v348, %v911
        %913 = vmatpush.xpose.msra.mxu0 %v912
        %v914 = vand.u32 %v345, 4294901760
        %v915 = vsub.f32 %v345, %v914
        %916 = vmatpush.xpose.msra.mxu0 %v915
        %v917 = vand.u32 %v342, 4294901760
        %v918 = vsub.f32 %v342, %v917
        %919 = vmatpush.xpose.msra.mxu0 %v918
        %v920 = vand.u32 %v291, 4294901760
        %v921 = vsub.f32 %v291, %v920
        %922 = vmatmul.f32.gmra.mxu0 %v921
        %v923 = vpop.f32.mrf.mxu0
        %v924 = vadd.f32 %v870, %v923
        %925 = vdwg.mxu0
        %v926 = vand.u32 %v387, 4294901760
        %927 = vmatpush.xpose.msra.mxu0 %v926
        %v928 = vand.u32 %v384, 4294901760
        %929 = vmatpush.xpose.msra.mxu0 %v928
        %v930 = vand.u32 %v381, 4294901760
        %931 = vmatpush.xpose.msra.mxu0 %v930
        %v932 = vand.u32 %v378, 4294901760
        %933 = vmatpush.xpose.msra.mxu0 %v932
        %v934 = vand.u32 %v375, 4294901760
        %935 = vmatpush.xpose.msra.mxu0 %v934
        %v936 = vand.u32 %v372, 4294901760
        %937 = vmatpush.xpose.msra.mxu0 %v936
        %v938 = vand.u32 %v369, 4294901760
        %939 = vmatpush.xpose.msra.mxu0 %v938
        %v940 = vand.u32 %v366, 4294901760
        %941 = vmatpush.xpose.msra.mxu0 %v940
        %v942 = vand.u32 %v363, 4294901760
        %943 = vmatpush.xpose.msra.mxu0 %v942
        %v944 = vand.u32 %v360, 4294901760
        %945 = vmatpush.xpose.msra.mxu0 %v944
        %v946 = vand.u32 %v357, 4294901760
        %947 = vmatpush.xpose.msra.mxu0 %v946
        %v948 = vand.u32 %v354, 4294901760
        %949 = vmatpush.xpose.msra.mxu0 %v948
        %v950 = vand.u32 %v351, 4294901760
        %951 = vmatpush.xpose.msra.mxu0 %v950
        %v952 = vand.u32 %v348, 4294901760
        %953 = vmatpush.xpose.msra.mxu0 %v952
        %v954 = vand.u32 %v345, 4294901760
        %955 = vmatpush.xpose.msra.mxu0 %v954
        %v956 = vand.u32 %v342, 4294901760
        %957 = vmatpush.xpose.msra.mxu0 %v956
        %v958 = vand.u32 %v291, 4294901760
        %v959 = vsub.f32 %v291, %v958
        %v960 = vand.u32 %v959, 4294901760
        %961 = vmatmul.f32.gmra.mxu0 %v960
        %v962 = vpop.f32.mrf.mxu0
        %v963 = vadd.f32 %v924, %v962
        %964 = vdwg.mxu0
        %v965 = vand.u32 %v387, 4294901760
        %v966 = vsub.f32 %v387, %v965
        %v967 = vand.u32 %v966, 4294901760
        %968 = vmatpush.xpose.msra.mxu0 %v967
        %v969 = vand.u32 %v384, 4294901760
        %v970 = vsub.f32 %v384, %v969
        %v971 = vand.u32 %v970, 4294901760
        %972 = vmatpush.xpose.msra.mxu0 %v971
        %v973 = vand.u32 %v381, 4294901760
        %v974 = vsub.f32 %v381, %v973
        %v975 = vand.u32 %v974, 4294901760
        %976 = vmatpush.xpose.msra.mxu0 %v975
        %v977 = vand.u32 %v378, 4294901760
        %v978 = vsub.f32 %v378, %v977
        %v979 = vand.u32 %v978, 4294901760
        %980 = vmatpush.xpose.msra.mxu0 %v979
        %v981 = vand.u32 %v375, 4294901760
        %v982 = vsub.f32 %v375, %v981
        %v983 = vand.u32 %v982, 4294901760
        %984 = vmatpush.xpose.msra.mxu0 %v983
        %v985 = vand.u32 %v372, 4294901760
        %v986 = vsub.f32 %v372, %v985
        %v987 = vand.u32 %v986, 4294901760
        %988 = vmatpush.xpose.msra.mxu0 %v987
        %v989 = vand.u32 %v369, 4294901760
        %v990 = vsub.f32 %v369, %v989
        %v991 = vand.u32 %v990, 4294901760
        %992 = vmatpush.xpose.msra.mxu0 %v991
        %v993 = vand.u32 %v366, 4294901760
        %v994 = vsub.f32 %v366, %v993
        %v995 = vand.u32 %v994, 4294901760
        %996 = vmatpush.xpose.msra.mxu0 %v995
        %v997 = vand.u32 %v363, 4294901760
        %v998 = vsub.f32 %v363, %v997
        %v999 = vand.u32 %v998, 4294901760
        %1000 = vmatpush.xpose.msra.mxu0 %v999
        %v1001 = vand.u32 %v360, 4294901760
        %v1002 = vsub.f32 %v360, %v1001
        %v1003 = vand.u32 %v1002, 4294901760
        %1004 = vmatpush.xpose.msra.mxu0 %v1003
        %v1005 = vand.u32 %v357, 4294901760
        %v1006 = vsub.f32 %v357, %v1005
        %v1007 = vand.u32 %v1006, 4294901760
        %1008 = vmatpush.xpose.msra.mxu0 %v1007
        %v1009 = vand.u32 %v354, 4294901760
        %v1010 = vsub.f32 %v354, %v1009
        %v1011 = vand.u32 %v1010, 4294901760
        %1012 = vmatpush.xpose.msra.mxu0 %v1011
        %v1013 = vand.u32 %v351, 4294901760
        %v1014 = vsub.f32 %v351, %v1013
        %v1015 = vand.u32 %v1014, 4294901760
        %1016 = vmatpush.xpose.msra.mxu0 %v1015
        %v1017 = vand.u32 %v348, 4294901760
        %v1018 = vsub.f32 %v348, %v1017
        %v1019 = vand.u32 %v1018, 4294901760
        %1020 = vmatpush.xpose.msra.mxu0 %v1019
        %v1021 = vand.u32 %v345, 4294901760
        %v1022 = vsub.f32 %v345, %v1021
        %v1023 = vand.u32 %v1022, 4294901760
        %1024 = vmatpush.xpose.msra.mxu0 %v1023
        %v1025 = vand.u32 %v342, 4294901760
        %v1026 = vsub.f32 %v342, %v1025
        %v1027 = vand.u32 %v1026, 4294901760
        %1028 = vmatpush.xpose.msra.mxu0 %v1027
        %v1029 = vand.u32 %v291, 4294901760
        %1030 = vmatmul.f32.gmra.mxu0 %v1029
        %v1031 = vpop.f32.mrf.mxu0
        %v1032 = vadd.f32 %v963, %v1031
        %1033 = vdwg.mxu0
        %v1034 = vand.u32 %v387, 4294901760
        %1035 = vmatpush.xpose.msra.mxu0 %v1034
        %v1036 = vand.u32 %v384, 4294901760
        %1037 = vmatpush.xpose.msra.mxu0 %v1036
        %v1038 = vand.u32 %v381, 4294901760
        %1039 = vmatpush.xpose.msra.mxu0 %v1038
        %v1040 = vand.u32 %v378, 4294901760
        %1041 = vmatpush.xpose.msra.mxu0 %v1040
        %v1042 = vand.u32 %v375, 4294901760
        %1043 = vmatpush.xpose.msra.mxu0 %v1042
        %v1044 = vand.u32 %v372, 4294901760
        %1045 = vmatpush.xpose.msra.mxu0 %v1044
        %v1046 = vand.u32 %v369, 4294901760
        %1047 = vmatpush.xpose.msra.mxu0 %v1046
        %v1048 = vand.u32 %v366, 4294901760
        %1049 = vmatpush.xpose.msra.mxu0 %v1048
        %v1050 = vand.u32 %v363, 4294901760
        %1051 = vmatpush.xpose.msra.mxu0 %v1050
        %v1052 = vand.u32 %v360, 4294901760
        %1053 = vmatpush.xpose.msra.mxu0 %v1052
        %v1054 = vand.u32 %v357, 4294901760
        %1055 = vmatpush.xpose.msra.mxu0 %v1054
        %v1056 = vand.u32 %v354, 4294901760
        %1057 = vmatpush.xpose.msra.mxu0 %v1056
        %v1058 = vand.u32 %v351, 4294901760
        %1059 = vmatpush.xpose.msra.mxu0 %v1058
        %v1060 = vand.u32 %v348, 4294901760
        %1061 = vmatpush.xpose.msra.mxu0 %v1060
        %v1062 = vand.u32 %v345, 4294901760
        %1063 = vmatpush.xpose.msra.mxu0 %v1062
        %v1064 = vand.u32 %v342, 4294901760
        %1065 = vmatpush.xpose.msra.mxu0 %v1064
        %v1066 = vand.u32 %v291, 4294901760
        %1067 = vmatmul.f32.gmra.mxu0 %v1066
        %v1068 = vpop.f32.mrf.mxu0
        %v1069 = vadd.f32 %v1032, %v1068
        %1070 = vdwg.mxu0
        %v1071 = vmul.f32 %v728, 0.5
        %v1072 = vmul.f32 %v1069, 0.5
        %v1073 = vtanh.pop %v1071
        %v1074 = vtanh.pop %v1072
        %v1075 = vmul.f32 %v1073, 0.5
        %v1076 = vmul.f32 %v1074, 0.5
        %v1077 = vadd.f32 %v1075, 0.5
        %v1078 = vadd.f32 %v1076, 0.5
        %v1079 = vld [vmem:[%s3] sm:$0x3]
        %v1080 = vld [vmem:[%s4] sm:$0x3]
        %1082 = vset.pattern.permute.xlu0 0
        %1083 = vperm.xlu0 %1082, %v1080
        %v1084 = vpop.permute.xlu0 %1083
        %vm1086 = vcmask 39936
        %v1088 = vsel %vm1086, %v1079, 0
        %vm1090 = vcmask 1044480
        %v1092 = vsel %vm1090, %v1077, 0
        %v1095 = vsel %vm1090, %v1078, 0
        %1097 = vmatpush.msra.mxu0 0.0
        %1098 = vmatpush.msra.mxu0 0.0
        %1099 = vmatpush.msra.mxu0 0.0
        %1100 = vmatpush.msra.mxu0 0.0
        %1101 = vmatpush.msra.mxu0 0.0
        %1102 = vmatpush.msra.mxu0 0.0
        %1103 = vmatpush.msra.mxu0 0.0
        %1104 = vmatpush.msra.mxu0 0.0
        %1105 = vmatpush.msra.mxu0 0.0
        %1106 = vmatpush.msra.mxu0 0.0
        %1107 = vmatpush.msra.mxu0 0.0
        %1108 = vmatpush.msra.mxu0 0.0
        %1109 = vmatpush.msra.mxu0 0.0
        %1110 = vmatpush.msra.mxu0 0.0
        %1111 = vmatpush.msra.mxu0 0.0
        %v1112 = vand.u32 %v1092, 4294901760
        %1113 = vmatpush.msra.mxu0 %v1112
        %v1114 = vand.u32 %v1088, 4294901760
        %v1115 = vsub.f32 %v1088, %v1114
        %v1116 = vand.u32 %v1115, 4294901760
        %v1117 = vsub.f32 %v1115, %v1116
        %v1118 = vand.u32 %v1117, 4294901760
        %1119 = vmatmul.f32.gmra.mxu0 %v1118
        %v1120 = vpop.f32.mrf.mxu0
        %v1121 = vadd.f32 %v1084, %v1120
        %1122 = vdwg.mxu0
        %1123 = vmatpush.msra.mxu0 0.0
        %1124 = vmatpush.msra.mxu0 0.0
        %1125 = vmatpush.msra.mxu0 0.0
        %1126 = vmatpush.msra.mxu0 0.0
        %1127 = vmatpush.msra.mxu0 0.0
        %1128 = vmatpush.msra.mxu0 0.0
        %1129 = vmatpush.msra.mxu0 0.0
        %1130 = vmatpush.msra.mxu0 0.0
        %1131 = vmatpush.msra.mxu0 0.0
        %1132 = vmatpush.msra.mxu0 0.0
        %1133 = vmatpush.msra.mxu0 0.0
        %1134 = vmatpush.msra.mxu0 0.0
        %1135 = vmatpush.msra.mxu0 0.0
        %1136 = vmatpush.msra.mxu0 0.0
        %1137 = vmatpush.msra.mxu0 0.0
        %v1138 = vand.u32 %v1092, 4294901760
        %v1139 = vsub.f32 %v1092, %v1138
        %v1140 = vand.u32 %v1139, 4294901760
        %v1141 = vsub.f32 %v1139, %v1140
        %v1142 = vand.u32 %v1141, 4294901760
        %1143 = vmatpush.msra.mxu0 %v1142
        %v1144 = vand.u32 %v1088, 4294901760
        %1145 = vmatmul.f32.gmra.mxu0 %v1144
        %v1146 = vpop.f32.mrf.mxu0
        %v1147 = vadd.f32 %v1121, %v1146
        %1148 = vdwg.mxu0
        %1149 = vmatpush.msra.mxu0 0.0
        %1150 = vmatpush.msra.mxu0 0.0
        %1151 = vmatpush.msra.mxu0 0.0
        %1152 = vmatpush.msra.mxu0 0.0
        %1153 = vmatpush.msra.mxu0 0.0
        %1154 = vmatpush.msra.mxu0 0.0
        %1155 = vmatpush.msra.mxu0 0.0
        %1156 = vmatpush.msra.mxu0 0.0
        %1157 = vmatpush.msra.mxu0 0.0
        %1158 = vmatpush.msra.mxu0 0.0
        %1159 = vmatpush.msra.mxu0 0.0
        %1160 = vmatpush.msra.mxu0 0.0
        %1161 = vmatpush.msra.mxu0 0.0
        %1162 = vmatpush.msra.mxu0 0.0
        %1163 = vmatpush.msra.mxu0 0.0
        %v1164 = vand.u32 %v1092, 4294901760
        %v1165 = vsub.f32 %v1092, %v1164
        %1166 = vmatpush.msra.mxu0 %v1165
        %v1167 = vand.u32 %v1088, 4294901760
        %v1168 = vsub.f32 %v1088, %v1167
        %1169 = vmatmul.f32.gmra.mxu0 %v1168
        %v1170 = vpop.f32.mrf.mxu0
        %v1171 = vadd.f32 %v1147, %v1170
        %1172 = vdwg.mxu0
        %1173 = vmatpush.msra.mxu0 0.0
        %1174 = vmatpush.msra.mxu0 0.0
        %1175 = vmatpush.msra.mxu0 0.0
        %1176 = vmatpush.msra.mxu0 0.0
        %1177 = vmatpush.msra.mxu0 0.0
        %1178 = vmatpush.msra.mxu0 0.0
        %1179 = vmatpush.msra.mxu0 0.0
        %1180 = vmatpush.msra.mxu0 0.0
        %1181 = vmatpush.msra.mxu0 0.0
        %1182 = vmatpush.msra.mxu0 0.0
        %1183 = vmatpush.msra.mxu0 0.0
        %1184 = vmatpush.msra.mxu0 0.0
        %1185 = vmatpush.msra.mxu0 0.0
        %1186 = vmatpush.msra.mxu0 0.0
        %1187 = vmatpush.msra.mxu0 0.0
        %v1188 = vand.u32 %v1092, 4294901760
        %1189 = vmatpush.msra.mxu0 %v1188
        %v1190 = vand.u32 %v1088, 4294901760
        %v1191 = vsub.f32 %v1088, %v1190
        %v1192 = vand.u32 %v1191, 4294901760
        %1193 = vmatmul.f32.gmra.mxu0 %v1192
        %v1194 = vpop.f32.mrf.mxu0
        %v1195 = vadd.f32 %v1171, %v1194
        %1196 = vdwg.mxu0
        %1197 = vmatpush.msra.mxu0 0.0
        %1198 = vmatpush.msra.mxu0 0.0
        %1199 = vmatpush.msra.mxu0 0.0
        %1200 = vmatpush.msra.mxu0 0.0
        %1201 = vmatpush.msra.mxu0 0.0
        %1202 = vmatpush.msra.mxu0 0.0
        %1203 = vmatpush.msra.mxu0 0.0
        %1204 = vmatpush.msra.mxu0 0.0
        %1205 = vmatpush.msra.mxu0 0.0
        %1206 = vmatpush.msra.mxu0 0.0
        %1207 = vmatpush.msra.mxu0 0.0
        %1208 = vmatpush.msra.mxu0 0.0
        %1209 = vmatpush.msra.mxu0 0.0
        %1210 = vmatpush.msra.mxu0 0.0
        %1211 = vmatpush.msra.mxu0 0.0
        %v1212 = vand.u32 %v1092, 4294901760
        %v1213 = vsub.f32 %v1092, %v1212
        %v1214 = vand.u32 %v1213, 4294901760
        %1215 = vmatpush.msra.mxu0 %v1214
        %v1216 = vand.u32 %v1088, 4294901760
        %1217 = vmatmul.f32.gmra.mxu0 %v1216
        %v1218 = vpop.f32.mrf.mxu0
        %v1219 = vadd.f32 %v1195, %v1218
        %1220 = vdwg.mxu0
        %1221 = vmatpush.msra.mxu0 0.0
        %1222 = vmatpush.msra.mxu0 0.0
        %1223 = vmatpush.msra.mxu0 0.0
        %1224 = vmatpush.msra.mxu0 0.0
        %1225 = vmatpush.msra.mxu0 0.0
        %1226 = vmatpush.msra.mxu0 0.0
        %1227 = vmatpush.msra.mxu0 0.0
        %1228 = vmatpush.msra.mxu0 0.0
        %1229 = vmatpush.msra.mxu0 0.0
        %1230 = vmatpush.msra.mxu0 0.0
        %1231 = vmatpush.msra.mxu0 0.0
        %1232 = vmatpush.msra.mxu0 0.0
        %1233 = vmatpush.msra.mxu0 0.0
        %1234 = vmatpush.msra.mxu0 0.0
        %1235 = vmatpush.msra.mxu0 0.0
        %v1236 = vand.u32 %v1092, 4294901760
        %1237 = vmatpush.msra.mxu0 %v1236
        %v1238 = vand.u32 %v1088, 4294901760
        %1239 = vmatmul.f32.gmra.mxu0 %v1238
        %v1240 = vpop.f32.mrf.mxu0
        %v1241 = vadd.f32 %v1219, %v1240
        %1242 = vdwg.mxu0
        %1243 = vmatpush.msra.mxu0 0.0
        %1244 = vmatpush.msra.mxu0 0.0
        %1245 = vmatpush.msra.mxu0 0.0
        %1246 = vmatpush.msra.mxu0 0.0
        %1247 = vmatpush.msra.mxu0 0.0
        %1248 = vmatpush.msra.mxu0 0.0
        %1249 = vmatpush.msra.mxu0 0.0
        %1250 = vmatpush.msra.mxu0 0.0
        %1251 = vmatpush.msra.mxu0 0.0
        %1252 = vmatpush.msra.mxu0 0.0
        %1253 = vmatpush.msra.mxu0 0.0
        %1254 = vmatpush.msra.mxu0 0.0
        %1255 = vmatpush.msra.mxu0 0.0
        %1256 = vmatpush.msra.mxu0 0.0
        %1257 = vmatpush.msra.mxu0 0.0
        %v1258 = vand.u32 %v1095, 4294901760
        %1259 = vmatpush.msra.mxu0 %v1258
        %v1260 = vand.u32 %v1088, 4294901760
        %v1261 = vsub.f32 %v1088, %v1260
        %v1262 = vand.u32 %v1261, 4294901760
        %v1263 = vsub.f32 %v1261, %v1262
        %v1264 = vand.u32 %v1263, 4294901760
        %1265 = vmatmul.f32.gmra.mxu0 %v1264
        %v1266 = vpop.f32.mrf.mxu0
        %v1267 = vadd.f32 %v1084, %v1266
        %1268 = vdwg.mxu0
        %1269 = vmatpush.msra.mxu0 0.0
        %1270 = vmatpush.msra.mxu0 0.0
        %1271 = vmatpush.msra.mxu0 0.0
        %1272 = vmatpush.msra.mxu0 0.0
        %1273 = vmatpush.msra.mxu0 0.0
        %1274 = vmatpush.msra.mxu0 0.0
        %1275 = vmatpush.msra.mxu0 0.0
        %1276 = vmatpush.msra.mxu0 0.0
        %1277 = vmatpush.msra.mxu0 0.0
        %1278 = vmatpush.msra.mxu0 0.0
        %1279 = vmatpush.msra.mxu0 0.0
        %1280 = vmatpush.msra.mxu0 0.0
        %1281 = vmatpush.msra.mxu0 0.0
        %1282 = vmatpush.msra.mxu0 0.0
        %1283 = vmatpush.msra.mxu0 0.0
        %v1284 = vand.u32 %v1095, 4294901760
        %v1285 = vsub.f32 %v1095, %v1284
        %v1286 = vand.u32 %v1285, 4294901760
        %v1287 = vsub.f32 %v1285, %v1286
        %v1288 = vand.u32 %v1287, 4294901760
        %1289 = vmatpush.msra.mxu0 %v1288
        %v1290 = vand.u32 %v1088, 4294901760
        %1291 = vmatmul.f32.gmra.mxu0 %v1290
        %v1292 = vpop.f32.mrf.mxu0
        %v1293 = vadd.f32 %v1267, %v1292
        %1294 = vdwg.mxu0
        %1295 = vmatpush.msra.mxu0 0.0
        %1296 = vmatpush.msra.mxu0 0.0
        %1297 = vmatpush.msra.mxu0 0.0
        %1298 = vmatpush.msra.mxu0 0.0
        %1299 = vmatpush.msra.mxu0 0.0
        %1300 = vmatpush.msra.mxu0 0.0
        %1301 = vmatpush.msra.mxu0 0.0
        %1302 = vmatpush.msra.mxu0 0.0
        %1303 = vmatpush.msra.mxu0 0.0
        %1304 = vmatpush.msra.mxu0 0.0
        %1305 = vmatpush.msra.mxu0 0.0
        %1306 = vmatpush.msra.mxu0 0.0
        %1307 = vmatpush.msra.mxu0 0.0
        %1308 = vmatpush.msra.mxu0 0.0
        %1309 = vmatpush.msra.mxu0 0.0
        %v1310 = vand.u32 %v1095, 4294901760
        %v1311 = vsub.f32 %v1095, %v1310
        %1312 = vmatpush.msra.mxu0 %v1311
        %v1313 = vand.u32 %v1088, 4294901760
        %v1314 = vsub.f32 %v1088, %v1313
        %1315 = vmatmul.f32.gmra.mxu0 %v1314
        %v1316 = vpop.f32.mrf.mxu0
        %v1317 = vadd.f32 %v1293, %v1316
        %1318 = vdwg.mxu0
        %1319 = vmatpush.msra.mxu0 0.0
        %1320 = vmatpush.msra.mxu0 0.0
        %1321 = vmatpush.msra.mxu0 0.0
        %1322 = vmatpush.msra.mxu0 0.0
        %1323 = vmatpush.msra.mxu0 0.0
        %1324 = vmatpush.msra.mxu0 0.0
        %1325 = vmatpush.msra.mxu0 0.0
        %1326 = vmatpush.msra.mxu0 0.0
        %1327 = vmatpush.msra.mxu0 0.0
        %1328 = vmatpush.msra.mxu0 0.0
        %1329 = vmatpush.msra.mxu0 0.0
        %1330 = vmatpush.msra.mxu0 0.0
        %1331 = vmatpush.msra.mxu0 0.0
        %1332 = vmatpush.msra.mxu0 0.0
        %1333 = vmatpush.msra.mxu0 0.0
        %v1334 = vand.u32 %v1095, 4294901760
        %1335 = vmatpush.msra.mxu0 %v1334
        %v1336 = vand.u32 %v1088, 4294901760
        %v1337 = vsub.f32 %v1088, %v1336
        %v1338 = vand.u32 %v1337, 4294901760
        %1339 = vmatmul.f32.gmra.mxu0 %v1338
        %v1340 = vpop.f32.mrf.mxu0
        %v1341 = vadd.f32 %v1317, %v1340
        %1342 = vdwg.mxu0
        %1343 = vmatpush.msra.mxu0 0.0
        %1344 = vmatpush.msra.mxu0 0.0
        %1345 = vmatpush.msra.mxu0 0.0
        %1346 = vmatpush.msra.mxu0 0.0
        %1347 = vmatpush.msra.mxu0 0.0
        %1348 = vmatpush.msra.mxu0 0.0
        %1349 = vmatpush.msra.mxu0 0.0
        %1350 = vmatpush.msra.mxu0 0.0
        %1351 = vmatpush.msra.mxu0 0.0
        %1352 = vmatpush.msra.mxu0 0.0
        %1353 = vmatpush.msra.mxu0 0.0
        %1354 = vmatpush.msra.mxu0 0.0
        %1355 = vmatpush.msra.mxu0 0.0
        %1356 = vmatpush.msra.mxu0 0.0
        %1357 = vmatpush.msra.mxu0 0.0
        %v1358 = vand.u32 %v1095, 4294901760
        %v1359 = vsub.f32 %v1095, %v1358
        %v1360 = vand.u32 %v1359, 4294901760
        %1361 = vmatpush.msra.mxu0 %v1360
        %v1362 = vand.u32 %v1088, 4294901760
        %1363 = vmatmul.f32.gmra.mxu0 %v1362
        %v1364 = vpop.f32.mrf.mxu0
        %v1365 = vadd.f32 %v1341, %v1364
        %1366 = vdwg.mxu0
        %1367 = vmatpush.msra.mxu0 0.0
        %1368 = vmatpush.msra.mxu0 0.0
        %1369 = vmatpush.msra.mxu0 0.0
        %1370 = vmatpush.msra.mxu0 0.0
        %1371 = vmatpush.msra.mxu0 0.0
        %1372 = vmatpush.msra.mxu0 0.0
        %1373 = vmatpush.msra.mxu0 0.0
        %1374 = vmatpush.msra.mxu0 0.0
        %1375 = vmatpush.msra.mxu0 0.0
        %1376 = vmatpush.msra.mxu0 0.0
        %1377 = vmatpush.msra.mxu0 0.0
        %1378 = vmatpush.msra.mxu0 0.0
        %1379 = vmatpush.msra.mxu0 0.0
        %1380 = vmatpush.msra.mxu0 0.0
        %1381 = vmatpush.msra.mxu0 0.0
        %v1382 = vand.u32 %v1095, 4294901760
        %1383 = vmatpush.msra.mxu0 %v1382
        %v1384 = vand.u32 %v1088, 4294901760
        %1385 = vmatmul.f32.gmra.mxu0 %v1384
        %v1386 = vpop.f32.mrf.mxu0
        %v1387 = vadd.f32 %v1365, %v1386
        %1388 = vdwg.mxu0
        %v1391 = vrot.slane %v1387, 6
        %vm1392 = vcmask 1041408
        %v1393 = vsel %vm1392, %v1241, %v1391
        %1395 = vst [vmem:[%s230] sm:$0xf] %v1393
        %s1396 = sand.u32 %s137, 1
        %s1397 = scalar_lea.sflag [#allocation3], %s1396
        %s1398 = sand.u32 %s137, 1
        %s1399 = smul.addr %s1398, 4
        %s1400 = scalar_lea.vmem [#allocation2], %s1399
        // Predicated region
        $region41: #{net_forward.1} parent=39 // pred_check
          %p1401 = pneg %p147
        $region42: #{net_forward.1} parent=39 // pred_check_branch
          %1403 = sbr.rel (%p1401) target = $region44
        $region43: #{net_forward.1} parent=39 // pred_region
          %s1404 = smul.u32 2, %s19
          %s1405 = ssub.s32 3, %s1404
          %p1406 = scmp.lt.s32.totalorder %s1405, 2
          %s1407 = scalar_select %p1406, %s1405, 2
          %s1408 = smul.u32 2, %s1407
          %s1409 = ssub.s32 4, %s1408
          %s1410 = sshll.u32 %s1409, 4
          %1411 = vsyncadd %s1397, %s1410
          %p1412 = scmp.ne.s32.totalorder 0, %s1408
          %s1413 = smul.addr %s1404, 2
          %s1414 = scalar_lea.hbm %s5, %s1413
          %s1415 = smul.u32 %s1407, 2
          %s1416 = sshll.u32 %s1415, 4
          %s1417 = sshll.u32 %s1400, 4
          %s1418 = int_to_ptr.vmem [resolvable:$true] %s1417
          %s1419 = sshll.u32 %s1414, 4
          %s1420 = int_to_ptr.hbm [resolvable:$true] %s1419
          %1422 = dma.vmem_to_hbm [thread:$0]  (%p1412), %s1418, %s1416, %s1420, %s1397
        $region44: #{net_forward.1} parent=39 // pred_fallthru
          _
      $region40: #{net_forward.1} parent=5 // pred_fallthru
        _
      %p1423 = scmp.le.s32.totalorder 2, %s14
      // Predicated region
      $region45: #{net_forward.1} parent=5 // pred_check
        %p1424 = pneg %p1423
      $region46: #{net_forward.1} parent=5 // pred_check_branch
        %1426 = sbr.rel (%p1424) target = $region48
      $region47: #{net_forward.1} parent=5 // pred_region
        %s1427 = ssub.s32 %s14, 2
        // Predicated region
        $region49: #{net_forward.1} parent=47 // pred_check
          %p1428 = pneg %p153
        $region50: #{net_forward.1} parent=47 // pred_check_branch
          %1430 = sbr.rel (%p1428) target = $region52
        $region51: #{net_forward.1} parent=47 // pred_region
          %s1431 = sand.u32 %s138, 1
          %s1432 = scalar_lea.sflag [#allocation3], %s1431
          %s1433 = sand.u32 %s138, 1
          %s1434 = smul.addr %s1433, 4
          %s1435 = scalar_lea.vmem [#allocation2], %s1434
          %1437 = dma.done %s1432, 64
        $region52: #{net_forward.1} parent=47 // pred_fallthru
          _
      $region48: #{net_forward.1} parent=5 // pred_fallthru
        _
    $region6: #{net_forward.1} parent=1 // loop_footer
      %s18 = sadd.s32 1, %s14
    $region7: #{net_forward.1} parent=1 // loop_footer_branch
      %13 = sbr.rel target = $region3
    $region8: #{net_forward.1} parent=1 // loop_exit
      _
    %1438 = vsyncpa [#allocation3], 1
    %s1439 = scalar_lea.sflag [#allocation3], 1
    %1440 = vsyncpa %s1439, 1

</llo_original>
